<compile_context>
chip_gen: v5e
topology: v5e:2x2
jax: 0.10.0
libtpu: 0.0.40
codegen_flags: <defaults>
</compile_context>

<pallas_src>
import functools

import jax
import jax.numpy as jnp
from jax.experimental import pallas as pl
from jax.experimental.pallas import tpu as pltpu

_LANE = 128     # TPU vreg lane width — output last dim padded to this
_SUBLANE = 8    # TPU vreg sublane count — batch tiles padded to this


def _linear_kernel(x_ref, w_ref, b_ref, o_ref):
    # x_ref: (TILE_B, D_in), w_ref: (D_in, D_out_pad),
    # b_ref: (1, D_out_pad), o_ref: (TILE_B, D_out_pad)
    acc = jnp.dot(x_ref[...], w_ref[...], preferred_element_type=jnp.float32)
    o_ref[...] = (acc + b_ref[...]).astype(o_ref.dtype)


def _round_up(n, m):
    return ((n + m - 1) // m) * m


@functools.partial(jax.jit, static_argnames=("max_tile_b",))
def linear_regression_forward(x, weight, bias, *, max_tile_b=512):
    """y = x @ weight.T + bias (same math as torch.nn.Linear forward).

    x:      (B, D_in)      float32
    weight: (D_out, D_in)  float32   (PyTorch nn.Linear layout)
    bias:   (D_out,)       float32
    returns (B, D_out)     float32
    """
    B, D_in = x.shape
    D_out = weight.shape[0]

    # Lane-dense padding of the output dimension.
    D_out_pad = _round_up(D_out, _LANE)

    # Batch tiling: tile rows, keep W/b resident across grid steps.
    tile_b = min(max_tile_b, _round_up(B, _SUBLANE))
    B_pad = _round_up(B, tile_b)

    # Pad operands with zeros (zero rows/cols do not perturb valid outputs).
    x_p = jnp.zeros((B_pad, D_in), x.dtype).at[:B, :].set(x)
    w_t = jnp.zeros((D_in, D_out_pad), weight.dtype).at[:, :D_out].set(weight.T)
    b_p = jnp.zeros((1, D_out_pad), bias.dtype).at[0, :D_out].set(bias)

    grid = (B_pad // tile_b,)
    bytes_f32 = 4
    cost = pl.CostEstimate(
        flops=2 * B_pad * D_in * D_out_pad,
        transcendentals=0,
        bytes_accessed=(x_p.size + w_t.size + b_p.size + B_pad * D_out_pad) * bytes_f32,
    )

    out_pad = pl.pallas_call(
        _linear_kernel,
        out_shape=jax.ShapeDtypeStruct((B_pad, D_out_pad), x.dtype),
        grid=grid,
        in_specs=[
            pl.BlockSpec((tile_b, D_in), lambda i: (i, 0)),        # x: tiled over batch
            pl.BlockSpec((D_in, D_out_pad), lambda i: (0, 0)),     # W: resident across steps
            pl.BlockSpec((1, D_out_pad), lambda i: (0, 0)),        # b: resident across steps
        ],
        out_specs=pl.BlockSpec((tile_b, D_out_pad), lambda i: (i, 0)),
        compiler_params=pltpu.CompilerParams(
            dimension_semantics=("parallel",),   # v7x: split batch tiles across 2 TCs
        ),
        cost_estimate=cost,
    )(x_p, w_t, b_p)

    # Strip padding back to the logical shape.
    return out_pad[:B, :D_out]


if __name__ == "__main__":
    # Shapes implied by the module: LinearRegression(inputDim=32, outputDim=16), batch=8.
    B, D_in, D_out = 8, 32, 16

    key = jax.random.PRNGKey(0)
    kx, kw, kb = jax.random.split(key, 3)

    # Deterministic nn.Linear-style init: U(-1/sqrt(D_in), 1/sqrt(D_in)).
    bound = 1.0 / (D_in ** 0.5)
    weight = jax.random.uniform(kw, (D_out, D_in), jnp.float32, -bound, bound)  # PyTorch layout
    bias = jax.random.uniform(kb, (D_out,), jnp.float32, -bound, bound)
    x = jax.random.normal(kx, (B, D_in), jnp.float32)

    out = linear_regression_forward(x, weight, bias)
    jax.block_until_ready(out)

    # Reference check against plain JAX (same math as torch.nn.Linear forward).
    ref = x @ weight.T + bias[None, :]
    assert out.shape == (B, D_out)
    assert jnp.allclose(out, ref, atol=1e-5, rtol=1e-5)

    print("KERNEL_OK")
</pallas_src>

<mosaic_0001>
module attributes {stable_mosaic.version = 11 : i64} {
  func.func @_linear_kernel(%arg0: i32, %arg1: memref<8x32xf32, #tpu.memory_space<vmem>>, %arg2: memref<32x128xf32, #tpu.memory_space<vmem>>, %arg3: memref<1x128xf32, #tpu.memory_space<vmem>>, %arg4: memref<8x128xf32, #tpu.memory_space<vmem>>) attributes {dimension_semantics = [#tpu.dimension_semantics<parallel>], iteration_bounds = array<i64: 1>, scalar_prefetch = 0 : i64, scratch_operands = 0 : i64, tpu.core_type = #tpu.core_type<tc>, window_params = [{transform_indices = @transform_0, window_bounds = array<i64: 8, 32>}, {pipeline_mode = #tpu.pipeline_mode<synchronous>, transform_indices = @transform_1, window_bounds = array<i64: 32, 128>}, {pipeline_mode = #tpu.pipeline_mode<synchronous>, transform_indices = @transform_2, window_bounds = array<i64: 1, 128>}, {transform_indices = @transform_3, window_bounds = array<i64: 8, 128>}]} {
    %c0 = arith.constant 0 : index
    %c0_0 = arith.constant 0 : index
    %0 = vector.load %arg1[%c0, %c0_0] : memref<8x32xf32, #tpu.memory_space<vmem>>, vector<8x32xf32>
    %c0_1 = arith.constant 0 : index
    %c0_2 = arith.constant 0 : index
    %1 = vector.load %arg2[%c0_1, %c0_2] : memref<32x128xf32, #tpu.memory_space<vmem>>, vector<32x128xf32>
    %cst = arith.constant dense<0.000000e+00> : vector<8x128xf32>
    %2 = tpu.matmul %0, %1, %cst {dimension_numbers = #tpu.dot_dimension_numbers<[1], [0], [0], [1], [0, 0, 1, 1], [], []>} : vector<8x32xf32>, vector<32x128xf32>, vector<8x128xf32> -> vector<8x128xf32>
    %c0_3 = arith.constant 0 : index
    %c0_4 = arith.constant 0 : index
    %3 = vector.load %arg3[%c0_3, %c0_4] : memref<1x128xf32, #tpu.memory_space<vmem>>, vector<1x128xf32>
    %4 = vector.broadcast %3 : vector<1x128xf32> to vector<8x128xf32>
    %5 = arith.addf %2, %4 : vector<8x128xf32>
    %c0_5 = arith.constant 0 : index
    %c0_6 = arith.constant 0 : index
    %6 = vector.load %arg4[%c0_5, %c0_6] : memref<8x128xf32, #tpu.memory_space<vmem>>, vector<8x128xf32>
    tpu.vector_store %arg4[%c0_5, %c0_6], %5 {strides = array<i32>} : memref<8x128xf32, #tpu.memory_space<vmem>>, vector<8x128xf32>,
    return
  }
  func.func @transform_0(%arg0: i32) -> (i32, i32) {
    %c0_i32 = arith.constant 0 : i32
    %c0_i32_0 = arith.constant 0 : i32
    return %arg0, %c0_i32 : i32, i32
  }
  func.func @transform_1(%arg0: i32) -> (i32, i32) {
    %c0_i32 = arith.constant 0 : i32
    %c0_i32_0 = arith.constant 0 : i32
    %c0_i32_1 = arith.constant 0 : i32
    return %c0_i32, %c0_i32_0 : i32, i32
  }
  func.func @transform_2(%arg0: i32) -> (i32, i32) {
    %c0_i32 = arith.constant 0 : i32
    %c0_i32_0 = arith.constant 0 : i32
    %c0_i32_1 = arith.constant 0 : i32
    return %c0_i32, %c0_i32_0 : i32, i32
  }
  func.func @transform_3(%arg0: i32) -> (i32, i32) {
    %c0_i32 = arith.constant 0 : i32
    %c0_i32_0 = arith.constant 0 : i32
    return %arg0, %c0_i32 : i32, i32
  }
}

</mosaic_0001>

<llo_original>
// kernel: linear_regression_forward.1
$region0: #{linear_regression_forward.1}
  #allocation0 [shape = 'u32[]', space=smem, size = 0x4, offset = 0x4, fixed_abs, tag = 'smem constant byte address 0x4 - core index']
  #allocation1 [shape = 'u32[72,128]{1,0:T(1,128)}', space=vmem, size = 0x9000, scoped, tag = 'internal scratch']
  %s0 = inlined_call_operand.vmem [shape: f32[8,32], index: 0, kind: input, shape index: {}]
  %s1 = inlined_call_operand.vmem [shape: f32[32,128], index: 1, kind: input, shape index: {}]
  %s2 = inlined_call_operand.vmem [shape: f32[1,128], index: 2, kind: input, shape index: {}]
  %s3 = inlined_call_operand.hbm [shape: f32[8,128], index: 3, kind: output, shape index: {}]
  %s4 = sld [smem:[#allocation0]]
  $region22: #{linear_regression_forward.1} parent=0
    _
  %s6 = ssub.s32 1, %s4
  %s7 = scalar_select 0, %s6, %s4
  $region1: #{linear_regression_forward.1} parent=0
    #allocation2 [shape = 'u8[4096]{0}', space=vmem, size = 0x1000, scoped, tag = 'output window, operand 0, single buffered']
    #allocation3 [shape = 's32[1]{0}', space=sflag, size = 0x4, scoped, tag = 'scoped memory for linear_regression_forward.1']
    %8 = vsyncpa [#allocation3], 0
    // Predicated region
    $region2: #{linear_regression_forward.1} parent=1 // pred_check
      _
    $region3: #{linear_regression_forward.1} parent=1 // pred_check_branch
      %10 = sbr.rel (0) target = $region5
    $region4: #{linear_regression_forward.1} parent=1 // pred_region
      _
    $region5: #{linear_regression_forward.1} parent=1 // pred_fallthru
      _
    // Predicated region
    $region6: #{linear_regression_forward.1} parent=1 // pred_check
      _
    $region7: #{linear_regression_forward.1} parent=1 // pred_check_branch
      %12 = sbr.rel (0) target = $region9
    $region8: #{linear_regression_forward.1} parent=1 // pred_region
      _
    $region9: #{linear_regression_forward.1} parent=1 // pred_fallthru
      _
    // Predicated region
    $region10: #{linear_regression_forward.1} parent=1 // pred_check
      _
    $region11: #{linear_regression_forward.1} parent=1 // pred_check_branch
      %14 = sbr.rel (0) target = $region13
    $region12: #{linear_regression_forward.1} parent=1 // pred_region
      _
    $region13: #{linear_regression_forward.1} parent=1 // pred_fallthru
      _
    %v15 = vld [vmem:[%s0] sm:$0xff]
    %v16 = vld [vmem:[%s1] sm:$0xff]
    %v17 = vld [vmem:[%s1 + $0x8] sm:$0xff]
    %v18 = vld [vmem:[%s1 + $0x10] sm:$0xff]
    %v19 = vld [vmem:[%s1 + $0x18] sm:$0xff]
    %v20 = vld [vmem:[%s2] sm:$0x1]
    %v22 = vperm.slane %v20, 0
    %vm24 = vcmask 261120
    %v26 = vsel %vm24, %v15, 0
    %28 = vmatpush.msra.mxu0 0.0
    %29 = vmatpush.msra.mxu0 0.0
    %30 = vmatpush.msra.mxu0 0.0
    %31 = vmatpush.msra.mxu0 0.0
    %32 = vmatpush.msra.mxu0 0.0
    %33 = vmatpush.msra.mxu0 0.0
    %34 = vmatpush.msra.mxu0 0.0
    %35 = vmatpush.msra.mxu0 0.0
    %36 = vmatpush.msra.mxu0 0.0
    %37 = vmatpush.msra.mxu0 0.0
    %38 = vmatpush.msra.mxu0 0.0
    %39 = vmatpush.msra.mxu0 0.0
    %40 = vmatpush.msra.mxu0 %v19
    %41 = vmatpush.msra.mxu0 %v18
    %42 = vmatpush.msra.mxu0 %v17
    %43 = vmatpush.msra.mxu0 %v16
    %44 = vmatmul.f32.gmra.mxu0 %v26
    %v45 = vpop.f32.mrf.mxu0
    %v46 = vadd.f32 %v22, %v45
    %47 = vdwg.mxu0
    %48 = vst [vmem:[#allocation2] sm:$0xff] %v46
    // Predicated region
    $region14: #{linear_regression_forward.1} parent=1 // pred_check
      _
    $region15: #{linear_regression_forward.1} parent=1 // pred_check_branch
      %50 = sbr.rel (0) target = $region17
    $region16: #{linear_regression_forward.1} parent=1 // pred_region
      %52 = vsyncadd [#allocation3], 0
      %s54 = sshll.u32 [#allocation2], 4
      %s55 = int_to_ptr.vmem [resolvable:$true] %s54
      %s56 = sshll.u32 %s3, 4
      %s57 = int_to_ptr.hbm [resolvable:$true] %s56
      %59 = dma.vmem_to_hbm [thread:$0]  %s55, 128, %s57, [#allocation3]
    $region17: #{linear_regression_forward.1} parent=1 // pred_fallthru
      _
    // Predicated region
    $region18: #{linear_regression_forward.1} parent=1 // pred_check
      _
    $region19: #{linear_regression_forward.1} parent=1 // pred_check_branch
      %61 = sbr.rel (0) target = $region21
    $region20: #{linear_regression_forward.1} parent=1 // pred_region
      %63 = dma.done [#allocation3], 128
    $region21: #{linear_regression_forward.1} parent=1 // pred_fallthru
      _
    %64 = vsyncpa [#allocation3], 1

</llo_original>
